<compile_context>
chip_gen: v6e
topology: v6e:2x2x1
jax: 0.10.0
libtpu: 0.0.40
codegen_flags: <defaults>
</compile_context>

<pallas_src>
import math
import functools

import jax
import jax.numpy as jnp
from jax import lax
from jax.experimental import pallas as pl
from jax.experimental.pallas import tpu as pltpu

LN_EPS = 1e-5                             # nn.LayerNorm default


# ----------------------------- VMEM budgets -----------------------------

def _tpu_vmem_capacity_bytes():
    try:
        info = pltpu.get_tpu_info()
        cap = getattr(info, "vmem_capacity_bytes", None)
        if cap:
            return int(cap)
    except Exception:
        pass
    return 64 * 1024 * 1024               # conservative (v7x-sized) fallback


_VMEM_CAP = _tpu_vmem_capacity_bytes()
_VMEM_LIMIT = min(int(_VMEM_CAP * 3 // 4), 100 * 1024 * 1024)   # 96MiB v5e/v6e, 48MiB v7x
_TILE_BUDGET = int(_VMEM_CAP * 3 // 8)


def _row_tile(n_rows, bytes_per_row, resident_bytes=0):
    """Row tile: full extent if it fits, otherwise the largest multiple of 256
    the budget allows (never an 8-row floor — tiny M starves the MXU)."""
    avail = max(_TILE_BUDGET - resident_bytes, 4 * 1024 * 1024)
    if n_rows * bytes_per_row <= avail:
        return n_rows
    t = min(1024, n_rows, avail // max(bytes_per_row, 1))
    t = max(256, (t // 256) * 256)
    return min(t, n_rows)


def _ff_k_tile(d_ff):
    """d_ff streaming tile: whole extent when small, else a 256-multiple divisor."""
    if d_ff <= 1024:
        return d_ff
    for tk in (512, 256, 128):
        if d_ff % tk == 0:
            return tk
    return d_ff


def _cparams(*sem):
    return pltpu.CompilerParams(dimension_semantics=sem,
                                vmem_limit_bytes=_VMEM_LIMIT)


# ----------------------------- Pallas kernels -----------------------------

def _layernorm(h, g, b):
    mean = jnp.mean(h, axis=-1, keepdims=True)
    var = jnp.mean((h - mean) ** 2, axis=-1, keepdims=True)   # biased (torch)
    return (h - mean) * lax.rsqrt(var + LN_EPS) * g + b


def _linear_kernel(x_ref, w_ref, b_ref, o_ref):
    # W pre-transposed to (in, out) and pre-cast to bf16; x cast to bf16 at the
    # MXU boundary; f32 accumulation; result stored in the output dtype (bf16).
    acc = jnp.dot(x_ref[...].astype(jnp.bfloat16), w_ref[...],
                  preferred_element_type=jnp.float32)
    o_ref[...] = (acc + b_ref[...]).astype(o_ref.dtype)


def _attn_kernel(q_ref, o_ref, *, scale):
    # One (batch, head) pair per grid step.  q == k == v (module quirk).
    # Matmuls in bf16 (f32 acc), softmax in f32, scale folded into q.
    q = q_ref[0, 0]                                              # (L, hd) bf16
    qs = (q.astype(jnp.float32) * scale).astype(jnp.bfloat16)
    s = lax.dot_general(qs, q, (((1,), (1,)), ((), ())),
                        preferred_element_type=jnp.float32)      # (L, L)
    s = s - jnp.max(s, axis=-1, keepdims=True)                   # stable softmax
    e = jnp.exp(s)
    p = e * pl.reciprocal(jnp.sum(e, axis=-1, keepdims=True), approx=True)
    o = jnp.dot(p.astype(jnp.bfloat16), q, preferred_element_type=jnp.float32)
    o_ref[0, 0] = o.astype(o_ref.dtype)


def _out_ffn_norm_kernel(x_ref, a_ref, wo_ref, bo_ref, g1_ref, b1n_ref,
                         w1_ref, bf1_ref, w2_ref, b2f_ref, g2_ref, b2n_ref,
                         o_ref, y_sc, acc_sc):
    # Fused: out_fc(attn) + residual + LN1, then FFN streamed over d_ff with an
    # f32 accumulator, then residual + LN2.  Grid = (row tiles, d_ff tiles).
    k = pl.program_id(1)

    @pl.when(k == 0)
    def _():
        proj = jnp.dot(a_ref[...], wo_ref[...],
                       preferred_element_type=jnp.float32) + bo_ref[...]
        y_sc[...] = _layernorm(x_ref[...] + proj, g1_ref[...], b1n_ref[...])
        acc_sc[...] = jnp.zeros_like(acc_sc)

    # acc += relu(y @ w1[:, k-th tile] + b1[k-th tile]) @ w2[k-th tile, :]
    h1 = jnp.dot(y_sc[...].astype(jnp.bfloat16), w1_ref[...],
                 preferred_element_type=jnp.float32) + bf1_ref[...]
    h1 = jnp.maximum(h1, 0.0).astype(jnp.bfloat16)
    acc_sc[...] += jnp.dot(h1, w2_ref[...], preferred_element_type=jnp.float32)

    @pl.when(k == pl.num_programs(1) - 1)
    def _():
        o_ref[...] = _layernorm(y_sc[...] + acc_sc[...] + b2f_ref[...],
                                g2_ref[...], b2n_ref[...])


# ----------------------------- wrappers -----------------------------

def pallas_wq(x2d, wq_t, bq):
    n, d_in = x2d.shape
    d_out = wq_t.shape[1]
    resident = 2 * (2 * d_in * d_out + 4 * d_out)          # db-buffered bf16 W + bias
    tile = _row_tile(n, 8 * d_in + 2 * d_in + 4 * d_out, resident)
    return pl.pallas_call(
        _linear_kernel,
        out_shape=jax.ShapeDtypeStruct((n, d_out), jnp.bfloat16),
        grid=(pl.cdiv(n, tile),),
        in_specs=[
            pl.BlockSpec((tile, d_in), lambda i: (i, 0)),
            pl.BlockSpec((d_in, d_out), lambda i: (0, 0)),   # resident weights
            pl.BlockSpec((1, d_out), lambda i: (0, 0)),
        ],
        out_specs=pl.BlockSpec((tile, d_out), lambda i: (i, 0)),
        compiler_params=_cparams("parallel"),
        cost_estimate=pl.CostEstimate(
            flops=2 * n * d_in * d_out, transcendentals=0,
            bytes_accessed=4 * n * d_in + 2 * (d_in * d_out + n * d_out) + 4 * d_out),
    )(x2d, wq_t, bq.reshape(1, d_out))


def pallas_attention(qkv4, head_dim):
    B, H, L, hd = qkv4.shape
    kernel = functools.partial(_attn_kernel, scale=1.0 / math.sqrt(head_dim))
    return pl.pallas_call(
        kernel,
        out_shape=jax.ShapeDtypeStruct((B, H, L, hd), jnp.bfloat16),
        grid=(B, H),
        in_specs=[pl.BlockSpec((1, 1, L, hd), lambda b, h: (b, h, 0, 0))],
        out_specs=pl.BlockSpec((1, 1, L, hd), lambda b, h: (b, h, 0, 0)),
        compiler_params=_cparams("parallel", "parallel"),
        cost_estimate=pl.CostEstimate(
            flops=4 * B * H * L * L * hd,
            transcendentals=B * H * L * (L + 1),
            bytes_accessed=4 * B * H * L * hd),
    )(qkv4)


def pallas_out_ffn_norm(x2d, attn_v, wo_t, bo, g1, b1n,
                        w1_t, bf1, w2_t, b2f, g2, b2n):
    n, D = x2d.shape
    d_ff = w1_t.shape[1]
    tk = _ff_k_tile(d_ff)
    resident = 2 * 2 * (D * D + 2 * D * tk) + 2 * 4 * (7 * D + tk)
    per_row = 2 * (4 * D + 2 * D + 4 * D) + 8 * D + 6 * tk
    tile = _row_tile(n, per_row, resident)
    return pl.pallas_call(
        _out_ffn_norm_kernel,
        out_shape=jax.ShapeDtypeStruct((n, D), jnp.float32),
        grid=(pl.cdiv(n, tile), pl.cdiv(d_ff, tk)),
        in_specs=[
            pl.BlockSpec((tile, D), lambda i, k: (i, 0)),      # x (residual, f32)
            pl.BlockSpec((tile, D), lambda i, k: (i, 0)),      # attn values (bf16)
            pl.BlockSpec((D, D), lambda i, k: (0, 0)),         # wo (bf16, resident)
            pl.BlockSpec((1, D), lambda i, k: (0, 0)),         # out_fc bias
            pl.BlockSpec((1, D), lambda i, k: (0, 0)),         # ln1 gamma
            pl.BlockSpec((1, D), lambda i, k: (0, 0)),         # ln1 beta
            pl.BlockSpec((D, tk), lambda i, k: (0, k)),        # w1 column tile
            pl.BlockSpec((1, tk), lambda i, k: (0, k)),        # ff1 bias tile
            pl.BlockSpec((tk, D), lambda i, k: (k, 0)),        # w2 row tile
            pl.BlockSpec((1, D), lambda i, k: (0, 0)),         # ff2 bias
            pl.BlockSpec((1, D), lambda i, k: (0, 0)),         # ln2 gamma
            pl.BlockSpec((1, D), lambda i, k: (0, 0)),         # ln2 beta
        ],
        out_specs=pl.BlockSpec((tile, D), lambda i, k: (i, 0)),
        scratch_shapes=[pltpu.VMEM((tile, D), jnp.float32),    # y (post-LN1)
                        pltpu.VMEM((tile, D), jnp.float32)],   # FFN accumulator
        compiler_params=_cparams("parallel", "arbitrary"),
        cost_estimate=pl.CostEstimate(
            flops=2 * n * D * D + 4 * n * D * d_ff + 20 * n * D,
            transcendentals=2 * n,
            bytes_accessed=(8 * n * D + 2 * n * D
                            + 2 * (D * D + 2 * D * d_ff) + 4 * (7 * D + d_ff))),
    )(x2d, attn_v, wo_t, bo.reshape(1, D), g1.reshape(1, D), b1n.reshape(1, D),
      w1_t, bf1.reshape(1, d_ff), w2_t, b2f.reshape(1, D),
      g2.reshape(1, D), b2n.reshape(1, D))


# ----------------------------- full layer -----------------------------

def prepare_params(params):
    """One-time prep (outside the per-call jit path): transpose Linear weights
    to (in, out) and cast them to bf16 for the MXU; biases / LN params stay f32."""
    return {
        "wq_t": jnp.asarray(params["wq_w"].T, jnp.bfloat16), "wq_b": params["wq_b"],
        "wo_t": jnp.asarray(params["wo_w"].T, jnp.bfloat16), "wo_b": params["wo_b"],
        "ff1_t": jnp.asarray(params["ff1_w"].T, jnp.bfloat16), "ff1_b": params["ff1_b"],
        "ff2_t": jnp.asarray(params["ff2_w"].T, jnp.bfloat16), "ff2_b": params["ff2_b"],
        "ln1_g": params["ln1_g"], "ln1_b": params["ln1_b"],
        "ln2_g": params["ln2_g"], "ln2_b": params["ln2_b"],
    }


@functools.partial(jax.jit, static_argnames=("n_head",))
def asl_transformer_encoder_layer(x, prep, *, n_head):
    B, L, D = x.shape
    H = n_head
    hd = D // H
    x2 = x.reshape(B * L, D)

    # q = k = v = wq(x)  (exactly as the PyTorch module does; wk/wv unused).
    qkv = pallas_wq(x2, prep["wq_t"], prep["wq_b"])             # (B*L, D) bf16

    # torch .view(b*n_head, l, head_dim) reinterprets each batch element's
    # (L, D) block as (H, L, hd) -> a free row-major reshape here.
    qkv4 = qkv.reshape(B, H, L, hd)
    attn4 = pallas_attention(qkv4, hd)                          # (B, H, L, hd) bf16
    attn_v = attn4.reshape(B * L, D)                            # == .view(b, l, d)

    # out_fc + residual + LN1 + FFN + residual + LN2 fused; y never hits HBM.
    out = pallas_out_ffn_norm(
        x2, attn_v, prep["wo_t"], prep["wo_b"], prep["ln1_g"], prep["ln1_b"],
        prep["ff1_t"], prep["ff1_b"], prep["ff2_t"], prep["ff2_b"],
        prep["ln2_g"], prep["ln2_b"])
    return out.reshape(B, L, D)


# ----------------------------- pure-JAX reference -----------------------------

def reference(x, p, n_head):
    B, L, D = x.shape
    hd = D // n_head

    def lin(v, w, b):
        return v @ w.T + b

    def ln(v, g, b):
        m = v.mean(-1, keepdims=True)
        var = ((v - m) ** 2).mean(-1, keepdims=True)
        return (v - m) / jnp.sqrt(var + LN_EPS) * g + b

    q = lin(x, p["wq_w"], p["wq_b"])                 # q = k = v
    qh = q.reshape(B * n_head, L, hd)
    s = jnp.einsum("bld,bmd->blm", qh, qh) / math.sqrt(hd)
    a = jax.nn.softmax(s, axis=-1)
    av = jnp.einsum("blm,bmd->bld", a, qh).reshape(B, L, D)
    y = ln(x + lin(av, p["wo_w"], p["wo_b"]), p["ln1_g"], p["ln1_b"])
    f = lin(jax.nn.relu(lin(y, p["ff1_w"], p["ff1_b"])), p["ff2_w"], p["ff2_b"])
    return ln(y + f, p["ln2_g"], p["ln2_b"])


# ----------------------------- parameter init -----------------------------

def init_params(key, d_model, d_ff):
    def linear_init(k, out_f, in_f):
        kw, kb = jax.random.split(k)
        bound = 1.0 / math.sqrt(in_f)
        w = jax.random.uniform(kw, (out_f, in_f), jnp.float32, -bound, bound)
        b = jax.random.uniform(kb, (out_f,), jnp.float32, -bound, bound)
        return w, b

    ks = jax.random.split(key, 4)
    wq_w, wq_b = linear_init(ks[0], d_model, d_model)
    wo_w, wo_b = linear_init(ks[1], d_model, d_model)
    ff1_w, ff1_b = linear_init(ks[2], d_ff, d_model)
    ff2_w, ff2_b = linear_init(ks[3], d_model, d_ff)
    return {
        "wq_w": wq_w, "wq_b": wq_b,
        "wo_w": wo_w, "wo_b": wo_b,
        "ff1_w": ff1_w, "ff1_b": ff1_b,
        "ff2_w": ff2_w, "ff2_b": ff2_b,
        "ln1_g": jnp.ones((d_model,), jnp.float32),
        "ln1_b": jnp.zeros((d_model,), jnp.float32),
        "ln2_g": jnp.ones((d_model,), jnp.float32),
        "ln2_b": jnp.zeros((d_model,), jnp.float32),
    }


if __name__ == "__main__":
    B, L, d_model, n_head, d_ff = 2, 8, 32, 4, 64

    key = jax.random.PRNGKey(0)
    kx, kp = jax.random.split(key)
    x = jax.random.normal(kx, (B, L, d_model), jnp.float32)
    params = init_params(kp, d_model, d_ff)
    prep = prepare_params(params)          # one-time: transpose + bf16 cast

    out = asl_transformer_encoder_layer(x, prep, n_head=n_head)
    out = jax.block_until_ready(out)

    ref = reference(x, params, n_head)
    assert out.shape == (B, L, d_model)
    # bf16 MXU operands + bf16 intermediates + approx softmax reciprocal
    # -> ~1e-2-level tolerance vs the pure-f32 reference.
    assert jnp.allclose(out, ref, atol=3e-2, rtol=3e-2), "mismatch vs reference"

    print("KERNEL_OK")
</pallas_src>

<mosaic_0001>
module attributes {stable_mosaic.version = 11 : i64} {
  func.func @_linear_kernel(%arg0: i32, %arg1: memref<16x32xf32, #tpu.memory_space<vmem>>, %arg2: memref<32x32xbf16, #tpu.memory_space<vmem>>, %arg3: memref<1x32xf32, #tpu.memory_space<vmem>>, %arg4: memref<16x32xbf16, #tpu.memory_space<vmem>>) attributes {dimension_semantics = [#tpu.dimension_semantics<parallel>], iteration_bounds = array<i64: 1>, scalar_prefetch = 0 : i64, scratch_operands = 0 : i64, tpu.core_type = #tpu.core_type<tc>, window_params = [{transform_indices = @transform_0, window_bounds = array<i64: 16, 32>}, {pipeline_mode = #tpu.pipeline_mode<synchronous>, transform_indices = @transform_1, window_bounds = array<i64: 32, 32>}, {pipeline_mode = #tpu.pipeline_mode<synchronous>, transform_indices = @transform_2, window_bounds = array<i64: 1, 32>}, {transform_indices = @transform_3, window_bounds = array<i64: 16, 32>}]} {
    %c0 = arith.constant 0 : index
    %c0_0 = arith.constant 0 : index
    %0 = vector.load %arg1[%c0, %c0_0] : memref<16x32xf32, #tpu.memory_space<vmem>>, vector<16x32xf32>
    %1 = arith.truncf %0 : vector<16x32xf32> to vector<16x32xbf16>
    %c0_1 = arith.constant 0 : index
    %c0_2 = arith.constant 0 : index
    %2 = vector.load %arg2[%c0_1, %c0_2] : memref<32x32xbf16, #tpu.memory_space<vmem>>, vector<32x32xbf16>
    %cst = arith.constant dense<0.000000e+00> : vector<16x32xf32>
    %3 = tpu.matmul %1, %2, %cst {dimension_numbers = #tpu.dot_dimension_numbers<[1], [0], [0], [1], [0, 0, 1, 1], [], []>} : vector<16x32xbf16>, vector<32x32xbf16>, vector<16x32xf32> -> vector<16x32xf32>
    %c0_3 = arith.constant 0 : index
    %c0_4 = arith.constant 0 : index
    %4 = vector.load %arg3[%c0_3, %c0_4] : memref<1x32xf32, #tpu.memory_space<vmem>>, vector<1x32xf32>
    %5 = vector.broadcast %4 : vector<1x32xf32> to vector<16x32xf32>
    %6 = arith.addf %3, %5 : vector<16x32xf32>
    %7 = arith.truncf %6 : vector<16x32xf32> to vector<16x32xbf16>
    %c0_5 = arith.constant 0 : index
    %c0_6 = arith.constant 0 : index
    %8 = vector.load %arg4[%c0_5, %c0_6] : memref<16x32xbf16, #tpu.memory_space<vmem>>, vector<16x32xbf16>
    tpu.vector_store %arg4[%c0_5, %c0_6], %7 {strides = array<i32>} : memref<16x32xbf16, #tpu.memory_space<vmem>>, vector<16x32xbf16>,
    return
  }
  func.func @transform_0(%arg0: i32) -> (i32, i32) {
    %c0_i32 = arith.constant 0 : i32
    %c0_i32_0 = arith.constant 0 : i32
    return %arg0, %c0_i32 : i32, i32
  }
  func.func @transform_1(%arg0: i32) -> (i32, i32) {
    %c0_i32 = arith.constant 0 : i32
    %c0_i32_0 = arith.constant 0 : i32
    %c0_i32_1 = arith.constant 0 : i32
    return %c0_i32, %c0_i32_0 : i32, i32
  }
  func.func @transform_2(%arg0: i32) -> (i32, i32) {
    %c0_i32 = arith.constant 0 : i32
    %c0_i32_0 = arith.constant 0 : i32
    %c0_i32_1 = arith.constant 0 : i32
    return %c0_i32, %c0_i32_0 : i32, i32
  }
  func.func @transform_3(%arg0: i32) -> (i32, i32) {
    %c0_i32 = arith.constant 0 : i32
    %c0_i32_0 = arith.constant 0 : i32
    return %arg0, %c0_i32 : i32, i32
  }
}

module attributes {stable_mosaic.version = 11 : i64} {
  func.func @_attn_kernel(%arg0: i32, %arg1: i32, %arg2: memref<1x1x8x8xbf16, #tpu.memory_space<vmem>>, %arg3: memref<1x1x8x8xbf16, #tpu.memory_space<vmem>>) attributes {dimension_semantics = [#tpu.dimension_semantics<parallel>, #tpu.dimension_semantics<parallel>], iteration_bounds = array<i64: 2, 4>, scalar_prefetch = 0 : i64, scratch_operands = 0 : i64, tpu.core_type = #tpu.core_type<tc>, window_params = [{transform_indices = @transform_0, window_bounds = array<i64: 1, 1, 8, 8>}, {transform_indices = @transform_1, window_bounds = array<i64: 1, 1, 8, 8>}]} {
    %c0 = arith.constant 0 : index
    %c0_0 = arith.constant 0 : index
    %c0_1 = arith.constant 0 : index
    %c0_2 = arith.constant 0 : index
    %0 = vector.load %arg2[%c0, %c0_0, %c0_1, %c0_2] : memref<1x1x8x8xbf16, #tpu.memory_space<vmem>>, vector<1x1x8x8xbf16>
    %1 = vector.shape_cast %0 : vector<1x1x8x8xbf16> to vector<8x8xbf16>
    %2 = arith.extf %1 : vector<8x8xbf16> to vector<8x8xf32>
    %cst = arith.constant 0.353553385 : f32
    %3 = vector.broadcast %cst : f32 to vector<8x8xf32>
    %4 = arith.mulf %2, %3 : vector<8x8xf32>
    %5 = arith.truncf %4 : vector<8x8xf32> to vector<8x8xbf16>
    %cst_3 = arith.constant dense<0.000000e+00> : vector<8x8xf32>
    %6 = tpu.matmul %5, %1, %cst_3 {dimension_numbers = #tpu.dot_dimension_numbers<[1], [1], [0], [0], [0, 0, 1, 0], [], []>} : vector<8x8xbf16>, vector<8x8xbf16>, vector<8x8xf32> -> vector<8x8xf32>
    %cst_4 = arith.constant dense<0xFF800000> : vector<8xf32>
    %7 = vector.multi_reduction <maximumf>, %6, %cst_4 [1] : vector<8x8xf32> to vector<8xf32>
    %8 = vector.shape_cast %7 : vector<8xf32> to vector<8x1xf32>
    %9 = vector.broadcast %8 : vector<8x1xf32> to vector<8x8xf32>
    %10 = arith.subf %6, %9 : vector<8x8xf32>
    %11 = math.exp %10 : vector<8x8xf32>
    %cst_5 = arith.constant dense<0.000000e+00> : vector<8xf32>
    %12 = vector.multi_reduction <add>, %11, %cst_5 [1] : vector<8x8xf32> to vector<8xf32>
    %13 = vector.shape_cast %12 : vector<8xf32> to vector<8x1xf32>
    %14 = tpu.reciprocal %13 {approx = true} : vector<8x1xf32> -> vector<8x1xf32>
    %15 = vector.broadcast %14 : vector<8x1xf32> to vector<8x8xf32>
    %16 = arith.mulf %11, %15 : vector<8x8xf32>
    %17 = arith.truncf %16 : vector<8x8xf32> to vector<8x8xbf16>
    %cst_6 = arith.constant dense<0.000000e+00> : vector<8x8xf32>
    %18 = tpu.matmul %17, %1, %cst_6 {dimension_numbers = #tpu.dot_dimension_numbers<[1], [0], [0], [1], [0, 0, 1, 1], [], []>} : vector<8x8xbf16>, vector<8x8xbf16>, vector<8x8xf32> -> vector<8x8xf32>
    %19 = arith.truncf %18 : vector<8x8xf32> to vector<8x8xbf16>
    %c0_7 = arith.constant 0 : index
    %c0_8 = arith.constant 0 : index
    %c0_9 = arith.constant 0 : index
    %c0_10 = arith.constant 0 : index
    %20 = vector.load %arg3[%c0_7, %c0_8, %c0_9, %c0_10] : memref<1x1x8x8xbf16, #tpu.memory_space<vmem>>, vector<1x1x8x8xbf16>
    %21 = vector.shape_cast %20 : vector<1x1x8x8xbf16> to vector<8x8xbf16>
    %22 = vector.shape_cast %19 : vector<8x8xbf16> to vector<1x1x8x8xbf16>
    tpu.vector_store %arg3[%c0_7, %c0_8, %c0_9, %c0_10], %22 {strides = array<i32>} : memref<1x1x8x8xbf16, #tpu.memory_space<vmem>>, vector<1x1x8x8xbf16>,
    return
  }
  func.func @transform_0(%arg0: i32, %arg1: i32) -> (i32, i32, i32, i32) {
    %c0_i32 = arith.constant 0 : i32
    %c0_i32_0 = arith.constant 0 : i32
    %c0_i32_1 = arith.constant 0 : i32
    return %arg0, %arg1, %c0_i32, %c0_i32_0 : i32, i32, i32, i32
  }
  func.func @transform_1(%arg0: i32, %arg1: i32) -> (i32, i32, i32, i32) {
    %c0_i32 = arith.constant 0 : i32
    %c0_i32_0 = arith.constant 0 : i32
    %c0_i32_1 = arith.constant 0 : i32
    return %arg0, %arg1, %c0_i32, %c0_i32_0 : i32, i32, i32, i32
  }
}

module attributes {stable_mosaic.version = 11 : i64} {
  func.func @_out_ffn_norm_kernel(%arg0: i32, %arg1: i32, %arg2: memref<16x32xf32, #tpu.memory_space<vmem>>, %arg3: memref<16x32xbf16, #tpu.memory_space<vmem>>, %arg4: memref<32x32xbf16, #tpu.memory_space<vmem>>, %arg5: memref<1x32xf32, #tpu.memory_space<vmem>>, %arg6: memref<1x32xf32, #tpu.memory_space<vmem>>, %arg7: memref<1x32xf32, #tpu.memory_space<vmem>>, %arg8: memref<32x64xbf16, #tpu.memory_space<vmem>>, %arg9: memref<1x64xf32, #tpu.memory_space<vmem>>, %arg10: memref<64x32xbf16, #tpu.memory_space<vmem>>, %arg11: memref<1x32xf32, #tpu.memory_space<vmem>>, %arg12: memref<1x32xf32, #tpu.memory_space<vmem>>, %arg13: memref<1x32xf32, #tpu.memory_space<vmem>>, %arg14: memref<16x32xf32, #tpu.memory_space<vmem>>, %arg15: memref<16x32xf32, #tpu.memory_space<vmem>>, %arg16: memref<16x32xf32, #tpu.memory_space<vmem>>) attributes {dimension_semantics = [#tpu.dimension_semantics<parallel>, #tpu.dimension_semantics<arbitrary>], iteration_bounds = array<i64: 1, 1>, scalar_prefetch = 0 : i64, scratch_operands = 2 : i64, tpu.core_type = #tpu.core_type<tc>, window_params = [{transform_indices = @transform_0, window_bounds = array<i64: 16, 32>}, {transform_indices = @transform_1, window_bounds = array<i64: 16, 32>}, {pipeline_mode = #tpu.pipeline_mode<synchronous>, transform_indices = @transform_2, window_bounds = array<i64: 32, 32>}, {pipeline_mode = #tpu.pipeline_mode<synchronous>, transform_indices = @transform_3, window_bounds = array<i64: 1, 32>}, {pipeline_mode = #tpu.pipeline_mode<synchronous>, transform_indices = @transform_4, window_bounds = array<i64: 1, 32>}, {pipeline_mode = #tpu.pipeline_mode<synchronous>, transform_indices = @transform_5, window_bounds = array<i64: 1, 32>}, {transform_indices = @transform_6, window_bounds = array<i64: 32, 64>}, {transform_indices = @transform_7, window_bounds = array<i64: 1, 64>}, {transform_indices = @transform_8, window_bounds = array<i64: 64, 32>}, {pipeline_mode = #tpu.pipeline_mode<synchronous>, transform_indices = @transform_9, window_bounds = array<i64: 1, 32>}, {pipeline_mode = #tpu.pipeline_mode<synchronous>, transform_indices = @transform_10, window_bounds = array<i64: 1, 32>}, {pipeline_mode = #tpu.pipeline_mode<synchronous>, transform_indices = @transform_11, window_bounds = array<i64: 1, 32>}, {transform_indices = @transform_12, window_bounds = array<i64: 16, 32>}]} {
    %c0_i32 = arith.constant 0 : i32
    %0 = arith.cmpi eq, %arg1, %c0_i32 : i32
    %1 = arith.extui %0 : i1 to i32
    %c0_i32_0 = arith.constant 0 : i32
    %2 = arith.cmpi ne, %1, %c0_i32_0 : i32
    scf.if %2 {
      %c0_16 = arith.constant 0 : index
      %c0_17 = arith.constant 0 : index
      %21 = vector.load %arg3[%c0_16, %c0_17] : memref<16x32xbf16, #tpu.memory_space<vmem>>, vector<16x32xbf16>
      %c0_18 = arith.constant 0 : index
      %c0_19 = arith.constant 0 : index
      %22 = vector.load %arg4[%c0_18, %c0_19] : memref<32x32xbf16, #tpu.memory_space<vmem>>, vector<32x32xbf16>
      %cst_20 = arith.constant dense<0.000000e+00> : vector<16x32xf32>
      %23 = tpu.matmul %21, %22, %cst_20 {dimension_numbers = #tpu.dot_dimension_numbers<[1], [0], [0], [1], [0, 0, 1, 1], [], []>} : vector<16x32xbf16>, vector<32x32xbf16>, vector<16x32xf32> -> vector<16x32xf32>
      %c0_21 = arith.constant 0 : index
      %c0_22 = arith.constant 0 : index
      %24 = vector.load %arg5[%c0_21, %c0_22] : memref<1x32xf32, #tpu.memory_space<vmem>>, vector<1x32xf32>
      %25 = vector.broadcast %24 : vector<1x32xf32> to vector<16x32xf32>
      %26 = arith.addf %23, %25 : vector<16x32xf32>
      %c0_23 = arith.constant 0 : index
      %c0_24 = arith.constant 0 : index
      %27 = vector.load %arg2[%c0_23, %c0_24] : memref<16x32xf32, #tpu.memory_space<vmem>>, vector<16x32xf32>
      %28 = arith.addf %27, %26 : vector<16x32xf32>
      %c0_25 = arith.constant 0 : index
      %c0_26 = arith.constant 0 : index
      %29 = vector.load %arg6[%c0_25, %c0_26] : memref<1x32xf32, #tpu.memory_space<vmem>>, vector<1x32xf32>
      %c0_27 = arith.constant 0 : index
      %c0_28 = arith.constant 0 : index
      %30 = vector.load %arg7[%c0_27, %c0_28] : memref<1x32xf32, #tpu.memory_space<vmem>>, vector<1x32xf32>
      %cst_29 = arith.constant dense<0.000000e+00> : vector<16xf32>
      %31 = vector.multi_reduction <add>, %28, %cst_29 [1] : vector<16x32xf32> to vector<16xf32>
      %32 = vector.shape_cast %31 : vector<16xf32> to vector<16x1xf32>
      %cst_30 = arith.constant 3.200000e+01 : f32
      %33 = vector.broadcast %cst_30 : f32 to vector<16x1xf32>
      %34 = arith.divf %32, %33 : vector<16x1xf32>
      %35 = vector.broadcast %34 : vector<16x1xf32> to vector<16x32xf32>
      %36 = arith.subf %28, %35 : vector<16x32xf32>
      %37 = arith.mulf %36, %36 : vector<16x32xf32>
      %cst_31 = arith.constant dense<0.000000e+00> : vector<16xf32>
      %38 = vector.multi_reduction <add>, %37, %cst_31 [1] : vector<16x32xf32> to vector<16xf32>
      %39 = vector.shape_cast %38 : vector<16xf32> to vector<16x1xf32>
      %cst_32 = arith.constant 3.200000e+01 : f32
      %40 = vector.broadcast %cst_32 : f32 to vector<16x1xf32>
      %41 = arith.divf %39, %40 : vector<16x1xf32>
      %42 = vector.broadcast %34 : vector<16x1xf32> to vector<16x32xf32>
      %43 = arith.subf %28, %42 : vector<16x32xf32>
      %cst_33 = arith.constant 9.99999974E-6 : f32
      %44 = vector.broadcast %cst_33 : f32 to vector<16x1xf32>
      %45 = arith.addf %41, %44 : vector<16x1xf32>
      %46 = math.rsqrt %45 : vector<16x1xf32>
      %47 = vector.broadcast %46 : vector<16x1xf32> to vector<16x32xf32>
      %48 = arith.mulf %43, %47 : vector<16x32xf32>
      %49 = vector.broadcast %29 : vector<1x32xf32> to vector<16x32xf32>
      %50 = arith.mulf %48, %49 : vector<16x32xf32>
      %51 = vector.broadcast %30 : vector<1x32xf32> to vector<16x32xf32>
      %52 = arith.addf %50, %51 : vector<16x32xf32>
      %c0_34 = arith.constant 0 : index
      %c0_35 = arith.constant 0 : index
      %53 = vector.load %arg15[%c0_34, %c0_35] : memref<16x32xf32, #tpu.memory_space<vmem>>, vector<16x32xf32>
      tpu.vector_store %arg15[%c0_34, %c0_35], %52 {strides = array<i32>} : memref<16x32xf32, #tpu.memory_space<vmem>>, vector<16x32xf32>,
      %cst_36 = arith.constant 0.000000e+00 : f32
      %54 = vector.broadcast %cst_36 : f32 to vector<16x32xf32>
      %c0_37 = arith.constant 0 : index
      %c0_38 = arith.constant 0 : index
      %55 = vector.load %arg16[%c0_37, %c0_38] : memref<16x32xf32, #tpu.memory_space<vmem>>, vector<16x32xf32>
      tpu.vector_store %arg16[%c0_37, %c0_38], %54 {strides = array<i32>} : memref<16x32xf32, #tpu.memory_space<vmem>>, vector<16x32xf32>,
    } else {
    }
    %c0 = arith.constant 0 : index
    %c0_1 = arith.constant 0 : index
    %3 = vector.load %arg15[%c0, %c0_1] : memref<16x32xf32, #tpu.memory_space<vmem>>, vector<16x32xf32>
    %4 = arith.truncf %3 : vector<16x32xf32> to vector<16x32xbf16>
    %c0_2 = arith.constant 0 : index
    %c0_3 = arith.constant 0 : index
    %5 = vector.load %arg8[%c0_2, %c0_3] : memref<32x64xbf16, #tpu.memory_space<vmem>>, vector<32x64xbf16>
    %cst = arith.constant dense<0.000000e+00> : vector<16x64xf32>
    %6 = tpu.matmul %4, %5, %cst {dimension_numbers = #tpu.dot_dimension_numbers<[1], [0], [0], [1], [0, 0, 1, 1], [], []>} : vector<16x32xbf16>, vector<32x64xbf16>, vector<16x64xf32> -> vector<16x64xf32>
    %c0_4 = arith.constant 0 : index
    %c0_5 = arith.constant 0 : index
    %7 = vector.load %arg9[%c0_4, %c0_5] : memref<1x64xf32, #tpu.memory_space<vmem>>, vector<1x64xf32>
    %8 = vector.broadcast %7 : vector<1x64xf32> to vector<16x64xf32>
    %9 = arith.addf %6, %8 : vector<16x64xf32>
    %cst_6 = arith.constant 0.000000e+00 : f32
    %10 = vector.broadcast %cst_6 : f32 to vector<16x64xf32>
    %11 = arith.maximumf %9, %10 : vector<16x64xf32>
    %12 = arith.truncf %11 : vector<16x64xf32> to vector<16x64xbf16>
    %c0_7 = arith.constant 0 : index
    %c0_8 = arith.constant 0 : index
    %13 = vector.load %arg16[%c0_7, %c0_8] : memref<16x32xf32, #tpu.memory_space<vmem>>, vector<16x32xf32>
    %c0_9 = arith.constant 0 : index
    %c0_10 = arith.constant 0 : index
    %14 = vector.load %arg10[%c0_9, %c0_10] : memref<64x32xbf16, #tpu.memory_space<vmem>>, vector<64x32xbf16>
    %cst_11 = arith.constant dense<0.000000e+00> : vector<16x32xf32>
    %15 = tpu.matmul %12, %14, %cst_11 {dimension_numbers = #tpu.dot_dimension_numbers<[1], [0], [0], [1], [0, 0, 1, 1], [], []>} : vector<16x64xbf16>, vector<64x32xbf16>, vector<16x32xf32> -> vector<16x32xf32>
    %16 = arith.addf %13, %15 : vector<16x32xf32>
    %c0_12 = arith.constant 0 : index
    %c0_13 = arith.constant 0 : index
    %17 = vector.load %arg16[%c0_12, %c0_13] : memref<16x32xf32, #tpu.memory_space<vmem>>, vector<16x32xf32>
    tpu.vector_store %arg16[%c0_12, %c0_13], %16 {strides = array<i32>} : memref<16x32xf32, #tpu.memory_space<vmem>>, vector<16x32xf32>,
    %c0_i32_14 = arith.constant 0 : i32
    %18 = arith.cmpi eq, %arg1, %c0_i32_14 : i32
    %19 = arith.extui %18 : i1 to i32
    %c0_i32_15 = arith.constant 0 : i32
    %20 = arith.cmpi ne, %19, %c0_i32_15 : i32
    scf.if %20 {
      %c0_16 = arith.constant 0 : index
      %c0_17 = arith.constant 0 : index
      %21 = vector.load %arg15[%c0_16, %c0_17] : memref<16x32xf32, #tpu.memory_space<vmem>>, vector<16x32xf32>
      %c0_18 = arith.constant 0 : index
      %c0_19 = arith.constant 0 : index
      %22 = vector.load %arg16[%c0_18, %c0_19] : memref<16x32xf32, #tpu.memory_space<vmem>>, vector<16x32xf32>
      %23 = arith.addf %21, %22 : vector<16x32xf32>
      %c0_20 = arith.constant 0 : index
      %c0_21 = arith.constant 0 : index
      %24 = vector.load %arg11[%c0_20, %c0_21] : memref<1x32xf32, #tpu.memory_space<vmem>>, vector<1x32xf32>
      %25 = vector.broadcast %24 : vector<1x32xf32> to vector<16x32xf32>
      %26 = arith.addf %23, %25 : vector<16x32xf32>
      %c0_22 = arith.constant 0 : index
      %c0_23 = arith.constant 0 : index
      %27 = vector.load %arg12[%c0_22, %c0_23] : memref<1x32xf32, #tpu.memory_space<vmem>>, vector<1x32xf32>
      %c0_24 = arith.constant 0 : index
      %c0_25 = arith.constant 0 : index
      %28 = vector.load %arg13[%c0_24, %c0_25] : memref<1x32xf32, #tpu.memory_space<vmem>>, vector<1x32xf32>
      %cst_26 = arith.constant dense<0.000000e+00> : vector<16xf32>
      %29 = vector.multi_reduction <add>, %26, %cst_26 [1] : vector<16x32xf32> to vector<16xf32>
      %30 = vector.shape_cast %29 : vector<16xf32> to vector<16x1xf32>
      %cst_27 = arith.constant 3.200000e+01 : f32
      %31 = vector.broadcast %cst_27 : f32 to vector<16x1xf32>
      %32 = arith.divf %30, %31 : vector<16x1xf32>
      %33 = vector.broadcast %32 : vector<16x1xf32> to vector<16x32xf32>
      %34 = arith.subf %26, %33 : vector<16x32xf32>
      %35 = arith.mulf %34, %34 : vector<16x32xf32>
      %cst_28 = arith.constant dense<0.000000e+00> : vector<16xf32>
      %36 = vector.multi_reduction <add>, %35, %cst_28 [1] : vector<16x32xf32> to vector<16xf32>
      %37 = vector.shape_cast %36 : vector<16xf32> to vector<16x1xf32>
      %cst_29 = arith.constant 3.200000e+01 : f32
      %38 = vector.broadcast %cst_29 : f32 to vector<16x1xf32>
      %39 = arith.divf %37, %38 : vector<16x1xf32>
      %40 = vector.broadcast %32 : vector<16x1xf32> to vector<16x32xf32>
      %41 = arith.subf %26, %40 : vector<16x32xf32>
      %cst_30 = arith.constant 9.99999974E-6 : f32
      %42 = vector.broadcast %cst_30 : f32 to vector<16x1xf32>
      %43 = arith.addf %39, %42 : vector<16x1xf32>
      %44 = math.rsqrt %43 : vector<16x1xf32>
      %45 = vector.broadcast %44 : vector<16x1xf32> to vector<16x32xf32>
      %46 = arith.mulf %41, %45 : vector<16x32xf32>
      %47 = vector.broadcast %27 : vector<1x32xf32> to vector<16x32xf32>
      %48 = arith.mulf %46, %47 : vector<16x32xf32>
      %49 = vector.broadcast %28 : vector<1x32xf32> to vector<16x32xf32>
      %50 = arith.addf %48, %49 : vector<16x32xf32>
      %c0_31 = arith.constant 0 : index
      %c0_32 = arith.constant 0 : index
      %51 = vector.load %arg14[%c0_31, %c0_32] : memref<16x32xf32, #tpu.memory_space<vmem>>, vector<16x32xf32>
      tpu.vector_store %arg14[%c0_31, %c0_32], %50 {strides = array<i32>} : memref<16x32xf32, #tpu.memory_space<vmem>>, vector<16x32xf32>,
    } else {
    }
    return
  }
  func.func @transform_0(%arg0: i32, %arg1: i32) -> (i32, i32) {
    %c0_i32 = arith.constant 0 : i32
    %c0_i32_0 = arith.constant 0 : i32
    return %arg0, %c0_i32 : i32, i32
  }
  func.func @transform_1(%arg0: i32, %arg1: i32) -> (i32, i32) {
    %c0_i32 = arith.constant 0 : i32
    %c0_i32_0 = arith.constant 0 : i32
    return %arg0, %c0_i32 : i32, i32
  }
  func.func @transform_2(%arg0: i32, %arg1: i32) -> (i32, i32) {
    %c0_i32 = arith.constant 0 : i32
    %c0_i32_0 = arith.constant 0 : i32
    %c0_i32_1 = arith.constant 0 : i32
    return %c0_i32, %c0_i32_0 : i32, i32
  }
  func.func @transform_3(%arg0: i32, %arg1: i32) -> (i32, i32) {
    %c0_i32 = arith.constant 0 : i32
    %c0_i32_0 = arith.constant 0 : i32
    %c0_i32_1 = arith.constant 0 : i32
    return %c0_i32, %c0_i32_0 : i32, i32
  }
  func.func @transform_4(%arg0: i32, %arg1: i32) -> (i32, i32) {
    %c0_i32 = arith.constant 0 : i32
    %c0_i32_0 = arith.constant 0 : i32
    %c0_i32_1 = arith.constant 0 : i32
    return %c0_i32, %c0_i32_0 : i32, i32
  }
  func.func @transform_5(%arg0: i32, %arg1: i32) -> (i32, i32) {
    %c0_i32 = arith.constant 0 : i32
    %c0_i32_0 = arith.constant 0 : i32
    %c0_i32_1 = arith.constant 0 : i32
    return %c0_i32, %c0_i32_0 : i32, i32
  }
  func.func @transform_6(%arg0: i32, %arg1: i32) -> (i32, i32) {
    %c0_i32 = arith.constant 0 : i32
    %c0_i32_0 = arith.constant 0 : i32
    return %c0_i32, %arg1 : i32, i32
  }
  func.func @transform_7(%arg0: i32, %arg1: i32) -> (i32, i32) {
    %c0_i32 = arith.constant 0 : i32
    %c0_i32_0 = arith.constant 0 : i32
    return %c0_i32, %arg1 : i32, i32
  }
  func.func @transform_8(%arg0: i32, %arg1: i32) -> (i32, i32) {
    %c0_i32 = arith.constant 0 : i32
    %c0_i32_0 = arith.constant 0 : i32
    return %arg1, %c0_i32 : i32, i32
  }
  func.func @transform_9(%arg0: i32, %arg1: i32) -> (i32, i32) {
    %c0_i32 = arith.constant 0 : i32
    %c0_i32_0 = arith.constant 0 : i32
    %c0_i32_1 = arith.constant 0 : i32
    return %c0_i32, %c0_i32_0 : i32, i32
  }
  func.func @transform_10(%arg0: i32, %arg1: i32) -> (i32, i32) {
    %c0_i32 = arith.constant 0 : i32
    %c0_i32_0 = arith.constant 0 : i32
    %c0_i32_1 = arith.constant 0 : i32
    return %c0_i32, %c0_i32_0 : i32, i32
  }
  func.func @transform_11(%arg0: i32, %arg1: i32) -> (i32, i32) {
    %c0_i32 = arith.constant 0 : i32
    %c0_i32_0 = arith.constant 0 : i32
    %c0_i32_1 = arith.constant 0 : i32
    return %c0_i32, %c0_i32_0 : i32, i32
  }
  func.func @transform_12(%arg0: i32, %arg1: i32) -> (i32, i32) {
    %c0_i32 = arith.constant 0 : i32
    %c0_i32_0 = arith.constant 0 : i32
    return %arg0, %c0_i32 : i32, i32
  }
}

</mosaic_0001>

<llo_original>
// kernel: asl_transformer_encoder_layer.3
$region0: #{asl_transformer_encoder_layer.3}
  #allocation0 [shape = 'u32[]', space=smem, size = 0x4, offset = 0x4, fixed_abs, tag = 'smem constant byte address 0x4 - core index']
  #allocation1 [shape = 'u32[144,128]{1,0:T(1,128)}', space=vmem, size = 0x12000, scoped, tag = 'internal scratch']
  %s0 = inlined_call_operand.vmem [shape: f32[16,32], index: 0, kind: input, shape index: {}]
  %s1 = inlined_call_operand.vmem [shape: bf16[32,32], index: 1, kind: input, shape index: {}]
  %s2 = inlined_call_operand.vmem [shape: f32[1,32], index: 2, kind: input, shape index: {}]
  %s3 = inlined_call_operand.vmem [shape: bf16[16,32], index: 3, kind: output, shape index: {}]
  %s4 = sld [smem:[#allocation0]]
  $region22: #{asl_transformer_encoder_layer.3} parent=0
    _
  %s6 = ssub.s32 1, %s4
  %s7 = scalar_select 0, %s6, %s4
  // Predicated region
  $region2: #{asl_transformer_encoder_layer.3} parent=0 // pred_check
    _
  $region3: #{asl_transformer_encoder_layer.3} parent=0 // pred_check_branch
    %9 = sbr.rel (0) target = $region5
  $region4: #{asl_transformer_encoder_layer.3} parent=0 // pred_region
    _
  $region5: #{asl_transformer_encoder_layer.3} parent=0 // pred_fallthru
    _
  // Predicated region
  $region6: #{asl_transformer_encoder_layer.3} parent=0 // pred_check
    _
  $region7: #{asl_transformer_encoder_layer.3} parent=0 // pred_check_branch
    %11 = sbr.rel (0) target = $region9
  $region8: #{asl_transformer_encoder_layer.3} parent=0 // pred_region
    _
  $region9: #{asl_transformer_encoder_layer.3} parent=0 // pred_fallthru
    _
  // Predicated region
  $region10: #{asl_transformer_encoder_layer.3} parent=0 // pred_check
    _
  $region11: #{asl_transformer_encoder_layer.3} parent=0 // pred_check_branch
    %13 = sbr.rel (0) target = $region13
  $region12: #{asl_transformer_encoder_layer.3} parent=0 // pred_region
    _
  $region13: #{asl_transformer_encoder_layer.3} parent=0 // pred_fallthru
    _
  %v15 = vld [vmem:[%s0] sm:$0xff]
  %v16 = vld [vmem:[%s0 + $0x8] sm:$0xff]
  %v17 = vpack.c.bf16 %v16, %v15
  %v18 = vld [vmem:[%s1] sm:$0xf]
  %v19 = vld [vmem:[%s1 + $0x4] sm:$0xf]
  %v20 = vld [vmem:[%s1 + $0x8] sm:$0xf]
  %v21 = vld [vmem:[%s1 + $0xc] sm:$0xf]
  %v22 = vld [vmem:[%s2] sm:$0x1]
  %v24 = vlaneseq
  %v25 = vshrl.u32 %v24, 7
  %v26 = vsub.s32 0, %v25
  %v27 = vrot.slane %v22, %v26
  %v33 = vunpack.c.l.b16 %v18
  %v34 = vunpack.c.l.b16 %v19
  %v35 = vunpack.c.l.b16 %v20
  %v36 = vunpack.c.l.b16 %v21
  %v37 = vpack.c.b16 %v34, %v33
  %v38 = vpack.c.b16 %v36, %v35
  %vm41 = vcmask 261120
  %v43 = vsel %vm41, %v17, 0
  %45 = vmatprep.subr.bf16.mxu0 0
  %46 = vmatpush1.bf16.msra.mxu0 0
  %47 = vmatprep.subr.bf16.mxu0 0
  %48 = vmatpush1.bf16.msra.mxu0 0
  %49 = vmatprep.subr.bf16.mxu0 0
  %50 = vmatpush1.bf16.msra.mxu0 0
  %51 = vmatprep.subr.bf16.mxu0 0
  %52 = vmatpush1.bf16.msra.mxu0 0
  %53 = vmatprep.subr.bf16.mxu0 0
  %54 = vmatpush1.bf16.msra.mxu0 0
  %55 = vmatprep.subr.bf16.mxu0 0
  %56 = vmatpush1.bf16.msra.mxu0 0
  %57 = vmatprep.subr.bf16.mxu0 0
  %58 = vmatpush1.bf16.msra.mxu0 %v38
  %59 = vmatprep.subr.bf16.mxu0 0
  %60 = vmatpush1.bf16.msra.mxu0 %v37
  %61 = vmatprep.subr.bf16.mxu0 0
  %62 = vmatpush2.bf16.msra.mxu0 0
  %63 = vmatprep.subr.bf16.mxu0 0
  %64 = vmatpush2.bf16.msra.mxu0 0
  %65 = vmatprep.subr.bf16.mxu0 0
  %66 = vmatpush2.bf16.msra.mxu0 0
  %67 = vmatprep.subr.bf16.mxu0 0
  %68 = vmatpush2.bf16.msra.mxu0 0
  %69 = vmatprep.subr.bf16.mxu0 0
  %70 = vmatpush2.bf16.msra.mxu0 0
  %71 = vmatprep.subr.bf16.mxu0 0
  %72 = vmatpush2.bf16.msra.mxu0 0
  %73 = vmatprep.subr.bf16.mxu0 0
  %74 = vmatpush2.bf16.msra.mxu0 0
  %75 = vmatprep.subr.bf16.mxu0 0
  %76 = vmatpush2.bf16.msra.mxu0 0
  %77 = vmatprep.mubr.bf16.mxu0 0
  %78 = vmatmul.mubr.bf16.gmra.mxu0 %v43
  %v79 = vpop.f32.mrf.mxu0
  %v80 = vadd.f32 %v27, %v79
  %v81 = vpop.f32.mrf.mxu0
  %v82 = vpop.f32.mrf.mxu0
  %v83 = vadd.f32 %v27, %v82
  %v84 = vpop.f32.mrf.mxu0
  %85 = vdwg.mxu0
  %v86 = vpack.c.bf16 %v83, %v80
  %v88 = vunpack.c.l.b16 %v86
  %v89 = vunpack.c.h.b16 %v86
  %v90 = vpack.c.b16 %v88, %v88
  %v91 = vpack.c.b16 %v89, %v89
  %vm94 = vcmask 257024
  %95 = vst.msk [vmem:[%s3] sm:$0xf] %vm94, %v90
  %96 = vst.msk [vmem:[%s3 + $0x4] sm:$0xf] %vm94, %v91
  // Predicated region
  $region14: #{asl_transformer_encoder_layer.3} parent=0 // pred_check
    _
  $region15: #{asl_transformer_encoder_layer.3} parent=0 // pred_check_branch
    %98 = sbr.rel (0) target = $region17
  $region16: #{asl_transformer_encoder_layer.3} parent=0 // pred_region
    _
  $region17: #{asl_transformer_encoder_layer.3} parent=0 // pred_fallthru
    _
  // Predicated region
  $region18: #{asl_transformer_encoder_layer.3} parent=0 // pred_check
    _
  $region19: #{asl_transformer_encoder_layer.3} parent=0 // pred_check_branch
    %100 = sbr.rel (0) target = $region21
  $region20: #{asl_transformer_encoder_layer.3} parent=0 // pred_region
    _
  $region21: #{asl_transformer_encoder_layer.3} parent=0 // pred_fallthru
    _

// kernel: asl_transformer_encoder_layer.4
$region0: #{asl_transformer_encoder_layer.4}
  #allocation0 [shape = 'u32[]', space=smem, size = 0x4, offset = 0x4, fixed_abs, tag = 'smem constant byte address 0x4 - core index']
  #allocation1 [shape = 'u32[144,128]{1,0:T(1,128)}', space=vmem, size = 0x12000, scoped, tag = 'internal scratch']
  %s0 = inlined_call_operand.vmem [shape: bf16[2,4,8,8], index: 0, kind: input, shape index: {}]
  %s1 = inlined_call_operand.vmem [shape: bf16[2,4,8,8], index: 1, kind: output, shape index: {}]
  %s2 = sld [smem:[#allocation0]]
  $region37: #{asl_transformer_encoder_layer.4} parent=0
    _
  %s4 = ssub.s32 1, %s2
  %s5 = scalar_select 0, %s4, %s2
  loop: start=0, step=1, limit=10
  $region2: #{asl_transformer_encoder_layer.4} parent=0 // loop_pre_header
    _
  $region3: #{asl_transformer_encoder_layer.4} parent=0 // loop_header
    %s7 = sphi 0, %s11
    %p8 = scmp.ge.s32.totalorder %s7, 10
    %s14 = sphi 0, %s26
    %s15 = sphi 0, %s22
    %s16 = sphi 0, %s14
    %s17 = sphi 0, %s15
    %s18 = sphi 0, %s16
    %s19 = sphi 0, %s17
    %s31 = sphi 0, %s33
    %s34 = sphi 0, %s31
    %s35 = sphi 0, %s34
    %s51 = sphi 0, %s35
    %s59 = sphi 0, %s61
    %s62 = sphi 0, %s59
    %s63 = sphi 0, %s62
    %s79 = sphi 0, %s63
  $region4: #{asl_transformer_encoder_layer.4} parent=0 // loop_header_branch
    %10 = sbr.rel (%p8) target = $region8
  $region5: #{asl_transformer_encoder_layer.4} parent=0 // loop_body
    %s12 = ssub.s32 %s7, 1
    %s13 = ssub.s32 %s7, 2
    %s20 = sadd.s32 1, %s15
    %p21 = scmp.ge.s32.totalorder %s20, 4
    %s22 = scalar_select %p21, 0, %s20
    %s23 = sadd.s32 1, %s14
    %s24 = scalar_select %p21, %s23, %s14
    %p25 = scmp.ge.s32.totalorder %s24, 2
    %s26 = scalar_select %p25, 0, %s24
    %s27 = ssub.s32 %s14, %s26
    %s28 = ssub.s32 %s15, %s22
    %s29 = sor.u32 %s27, %s28
    %p30 = scmp.eq.s32.totalorder %s29, 0
    %s32 = sadd.s32 %s31, 1
    %s33 = scalar_select %p30, %s31, %s32
    %p36 = pneg %p30
    %p37 = scmp.eq.s32.totalorder %s7, 7
    %p38 = por %p36, %p37
    %p39 = scmp.ne.s32.totalorder %s31, %s34
    %p40 = scmp.eq.s32.totalorder %s7, 0
    %p41 = por %p39, %p40
    %p42 = scmp.ne.s32.totalorder %s31, %s34
    %p43 = scmp.eq.s32.totalorder %s12, 7
    %p44 = por %p42, %p43
    %p45 = scmp.ne.s32.totalorder %s34, %s35
    %p46 = scmp.eq.s32.totalorder %s12, 0
    %p47 = por %p45, %p46
    %p48 = scmp.ne.s32.totalorder %s34, %s35
    %p49 = scmp.eq.s32.totalorder %s13, 7
    %p50 = por %p48, %p49
    %p52 = scmp.ne.s32.totalorder %s35, %s51
    %p53 = scmp.eq.s32.totalorder %s13, 0
    %p54 = por %p52, %p53
    %s55 = ssub.s32 %s14, %s26
    %s56 = ssub.s32 %s15, %s22
    %s57 = sor.u32 %s55, %s56
    %p58 = scmp.eq.s32.totalorder %s57, 0
    %s60 = sadd.s32 %s59, 1
    %s61 = scalar_select %p58, %s59, %s60
    %p64 = pneg %p58
    %p65 = scmp.eq.s32.totalorder %s7, 7
    %p66 = por %p64, %p65
    %p67 = scmp.ne.s32.totalorder %s59, %s62
    %p68 = scmp.eq.s32.totalorder %s7, 0
    %p69 = por %p67, %p68
    %p70 = scmp.ne.s32.totalorder %s59, %s62
    %p71 = scmp.eq.s32.totalorder %s12, 7
    %p72 = por %p70, %p71
    %p73 = scmp.ne.s32.totalorder %s62, %s63
    %p74 = scmp.eq.s32.totalorder %s12, 0
    %p75 = por %p73, %p74
    %p76 = scmp.ne.s32.totalorder %s62, %s63
    %p77 = scmp.eq.s32.totalorder %s13, 7
    %p78 = por %p76, %p77
    %p80 = scmp.ne.s32.totalorder %s63, %s79
    %p81 = scmp.eq.s32.totalorder %s13, 0
    %p82 = por %p80, %p81
    %p83 = scmp.le.s32.totalorder 1, %s7
    %p84 = scmp.lt.s32.totalorder %s7, 9
    %p85 = pnand %p83, %p84
    %p86 = pneg %p85
    // Predicated region
    $region9: #{asl_transformer_encoder_layer.4} parent=5 // pred_check
      _
    $region10: #{asl_transformer_encoder_layer.4} parent=5 // pred_check_branch
      %88 = sbr.rel (%p85) target = $region12
    $region11: #{asl_transformer_encoder_layer.4} parent=5 // pred_region
      %s89 = ssub.s32 %s7, 1
    $region12: #{asl_transformer_encoder_layer.4} parent=5 // pred_fallthru
      _
    %p90 = scmp.lt.s32.totalorder %s7, 8
    // Predicated region
    $region13: #{asl_transformer_encoder_layer.4} parent=5 // pred_check
      %p91 = pneg %p90
    $region14: #{asl_transformer_encoder_layer.4} parent=5 // pred_check_branch
      %93 = sbr.rel (%p91) target = $region16
    $region15: #{asl_transformer_encoder_layer.4} parent=5 // pred_region
      // Predicated region
      $region17: #{asl_transformer_encoder_layer.4} parent=15 // pred_check
        %p94 = pneg %p41
      $region18: #{asl_transformer_encoder_layer.4} parent=15 // pred_check_branch
        %96 = sbr.rel (%p94) target = $region20
      $region19: #{asl_transformer_encoder_layer.4} parent=15 // pred_region
        %p97 = scmp.lt.s32.totalorder %s14, 1
        %s98 = scalar_select %p97, %s14, 1
        %p99 = scmp.lt.s32.totalorder %s15, 3
        %s100 = scalar_select %p99, %s15, 3
        %s101 = smul.addr %s98, 4
        %s102 = sadd.s32 %s100, %s101
        %s103 = smul.addr %s102, 4
        %s104 = scalar_lea.vmem %s0, %s103
      $region20: #{asl_transformer_encoder_layer.4} parent=15 // pred_fallthru
        _
    $region16: #{asl_transformer_encoder_layer.4} parent=5 // pred_fallthru
      _
    %p105 = scmp.le.s32.totalorder 1, %s7
    %p106 = scmp.lt.s32.totalorder %s7, 9
    %p107 = pnand %p105, %p106
    %p108 = pneg %p107
    // Predicated region
    $region21: #{asl_transformer_encoder_layer.4} parent=5 // pred_check
      _
    $region22: #{asl_transformer_encoder_layer.4} parent=5 // pred_check_branch
      %110 = sbr.rel (%p107) target = $region24
    $region23: #{asl_transformer_encoder_layer.4} parent=5 // pred_region
      %s111 = ssub.s32 %s7, 1
      %p112 = scmp.lt.s32.totalorder %s16, 1
      %s113 = scalar_select %p112, %s16, 1
      %p114 = scmp.lt.s32.totalorder %s17, 3
      %s115 = scalar_select %p114, %s17, 3
      %s116 = smul.addr %s113, 4
      %s117 = sadd.s32 %s115, %s116
      %s118 = smul.addr %s117, 4
      %s119 = scalar_lea.vmem %s0, %s118
      %p120 = pneg %p47
      %p121 = pneg %p44
      %p122 = pneg %p75
      %p123 = pneg %p72
      %p124 = scmp.lt.s32.totalorder %s16, 1
      %s125 = scalar_select %p124, %s16, 1
      %p126 = scmp.lt.s32.totalorder %s17, 3
      %s127 = scalar_select %p126, %s17, 3
      %s128 = smul.addr %s125, 4
      %s129 = sadd.s32 %s127, %s128
      %s130 = smul.addr %s129, 4
      %s131 = scalar_lea.vmem %s1, %s130
      %p132 = scmp.lt.s32.totalorder %s16, 1
      %s133 = scalar_select %p132, %s16, 1
      %p134 = scmp.lt.s32.totalorder %s17, 3
      %s135 = scalar_select %p134, %s17, 3
      %s136 = smul.addr %s133, 4
      %s137 = sadd.s32 %s135, %s136
      %s138 = smul.addr %s137, 4
      %s139 = scalar_lea.vmem %s0, %s138
      %p140 = scmp.lt.s32.totalorder %s16, 1
      %s141 = scalar_select %p140, %s16, 1
      %p142 = scmp.lt.s32.totalorder %s17, 3
      %s143 = scalar_select %p142, %s17, 3
      %s144 = smul.addr %s141, 4
      %s145 = sadd.s32 %s143, %s144
      %s146 = smul.addr %s145, 4
      %s147 = scalar_lea.vmem %s1, %s146
      %v149 = vld [vmem:[%s139] sm:$0xf]
      %v150 = vunpack.c.l.bf16 %v149
      %v151 = vmul.f32 %v150, 0.35355338
      %v152 = vpack.c.bf16 %v151, %v151
      %vm153 = vcmask 64512
      %v155 = vsel %vm153, %v152, 0
      %v158 = vsel %vm153, %v149, 0
      %160 = vmatprep.subr.bf16.mxu0 0
      %161 = vmatpush1.bf16.xpose.msra.mxu0 0
      %162 = vmatprep.subr.bf16.mxu0 0
      %163 = vmatpush1.bf16.xpose.msra.mxu0 0
      %164 = vmatprep.subr.bf16.mxu0 0
      %165 = vmatpush1.bf16.xpose.msra.mxu0 0
      %166 = vmatprep.subr.bf16.mxu0 0
      %167 = vmatpush1.bf16.xpose.msra.mxu0 0
      %168 = vmatprep.subr.bf16.mxu0 0
      %169 = vmatpush1.bf16.xpose.msra.mxu0 0
      %170 = vmatprep.subr.bf16.mxu0 0
      %171 = vmatpush1.bf16.xpose.msra.mxu0 0
      %172 = vmatprep.subr.bf16.mxu0 0
      %173 = vmatpush1.bf16.xpose.msra.mxu0 0
      %174 = vmatprep.subr.bf16.mxu0 0
      %175 = vmatpush1.bf16.xpose.msra.mxu0 %v158
      %176 = vmatprep.subr.bf16.mxu0 0
      %177 = vmatpush2.bf16.xpose.msra.mxu0 0
      %178 = vmatprep.subr.bf16.mxu0 0
      %179 = vmatpush2.bf16.xpose.msra.mxu0 0
      %180 = vmatprep.subr.bf16.mxu0 0
      %181 = vmatpush2.bf16.xpose.msra.mxu0 0
      %182 = vmatprep.subr.bf16.mxu0 0
      %183 = vmatpush2.bf16.xpose.msra.mxu0 0
      %184 = vmatprep.subr.bf16.mxu0 0
      %185 = vmatpush2.bf16.xpose.msra.mxu0 0
      %186 = vmatprep.subr.bf16.mxu0 0
      %187 = vmatpush2.bf16.xpose.msra.mxu0 0
      %188 = vmatprep.subr.bf16.mxu0 0
      %189 = vmatpush2.bf16.xpose.msra.mxu0 0
      %190 = vmatprep.subr.bf16.mxu0 0
      %191 = vmatpush2.bf16.xpose.msra.mxu0 0
      %192 = vmatprep.mubr.bf16.mxu0 0
      %193 = vmatmul.mubr.bf16.gmra.mxu0 %v155
      %v194 = vpop.f32.mrf.mxu0
      %v195 = vadd.f32 0.0, %v194
      %v196 = vpop.f32.mrf.mxu0
      %v197 = vpop.f32.mrf.mxu0
      %v198 = vpop.f32.mrf.mxu0
      %199 = vdwg.mxu0
      %v200 = vsel %vm153, %v195, -inf
      %201 = vmax.xlane.f32.xlu0 %v200
      %v202 = vpop.xlane.xlu0 %201
      %v203 = vsub.f32 %v195, %v202
      %v204 = vmul.f32 %v203, 1.442695
      %v205 = vpow.pop %v204
      %v206 = vsel %vm153, %v205, 0.0
      %207 = vadd.xlane.f32.xlu0 %v206
      %v208 = vpop.xlane.xlu0 %207
      %v209 = vrcp.pop %v208
      %v210 = vmul.f32 %v205, %v209
      %v211 = vpack.c.bf16 %v210, %v210
      %v213 = vsel %vm153, %v211, 0
      %vm215 = vcmask 1043456
      %v216 = vsel %vm215, %v149, 0
      %218 = vmatprep.subr.bf16.mxu0 0
      %219 = vmatpush1.bf16.msra.mxu0 0
      %220 = vmatprep.subr.bf16.mxu0 0
      %221 = vmatpush1.bf16.msra.mxu0 0
      %222 = vmatprep.subr.bf16.mxu0 0
      %223 = vmatpush1.bf16.msra.mxu0 0
      %224 = vmatprep.subr.bf16.mxu0 0
      %225 = vmatpush1.bf16.msra.mxu0 0
      %226 = vmatprep.subr.bf16.mxu0 0
      %227 = vmatpush1.bf16.msra.mxu0 0
      %228 = vmatprep.subr.bf16.mxu0 0
      %229 = vmatpush1.bf16.msra.mxu0 0
      %230 = vmatprep.subr.bf16.mxu0 0
      %231 = vmatpush1.bf16.msra.mxu0 0
      %232 = vmatprep.subr.bf16.mxu0 0
      %233 = vmatpush1.bf16.msra.mxu0 %v216
      %234 = vmatprep.subr.bf16.mxu0 0
      %235 = vmatpush2.bf16.msra.mxu0 0
      %236 = vmatprep.subr.bf16.mxu0 0
      %237 = vmatpush2.bf16.msra.mxu0 0
      %238 = vmatprep.subr.bf16.mxu0 0
      %239 = vmatpush2.bf16.msra.mxu0 0
      %240 = vmatprep.subr.bf16.mxu0 0
      %241 = vmatpush2.bf16.msra.mxu0 0
      %242 = vmatprep.subr.bf16.mxu0 0
      %243 = vmatpush2.bf16.msra.mxu0 0
      %244 = vmatprep.subr.bf16.mxu0 0
      %245 = vmatpush2.bf16.msra.mxu0 0
      %246 = vmatprep.subr.bf16.mxu0 0
      %247 = vmatpush2.bf16.msra.mxu0 0
      %248 = vmatprep.subr.bf16.mxu0 0
      %249 = vmatpush2.bf16.msra.mxu0 0
      %250 = vmatprep.mubr.bf16.mxu0 0
      %251 = vmatmul.mubr.bf16.gmra.mxu0 %v213
      %v252 = vpop.f32.mrf.mxu0
      %v253 = vadd.f32 0.0, %v252
      %v254 = vpop.f32.mrf.mxu0
      %v255 = vpop.f32.mrf.mxu0
      %v256 = vpop.f32.mrf.mxu0
      %257 = vdwg.mxu0
      %v258 = vpack.c.bf16 %v253, %v253
      %vm259 = vcmask 60416
      %260 = vst.msk [vmem:[%s147] sm:$0xf] %vm259, %v258
      %p261 = scmp.lt.s32.totalorder %s16, 1
      %s262 = scalar_select %p261, %s16, 1
      %p263 = scmp.lt.s32.totalorder %s17, 3
      %s264 = scalar_select %p263, %s17, 3
      %s265 = smul.addr %s262, 4
      %s266 = sadd.s32 %s264, %s265
      %s267 = smul.addr %s266, 4
      %s268 = scalar_lea.vmem %s1, %s267
      // Predicated region
      $region25: #{asl_transformer_encoder_layer.4} parent=23 // pred_check
        %p269 = pneg %p72
      $region26: #{asl_transformer_encoder_layer.4} parent=23 // pred_check_branch
        %271 = sbr.rel (%p269) target = $region28
      $region27: #{asl_transformer_encoder_layer.4} parent=23 // pred_region
        _
      $region28: #{asl_transformer_encoder_layer.4} parent=23 // pred_fallthru
        _
    $region24: #{asl_transformer_encoder_layer.4} parent=5 // pred_fallthru
      _
    %p272 = scmp.le.s32.totalorder 2, %s7
    // Predicated region
    $region29: #{asl_transformer_encoder_layer.4} parent=5 // pred_check
      %p273 = pneg %p272
    $region30: #{asl_transformer_encoder_layer.4} parent=5 // pred_check_branch
      %275 = sbr.rel (%p273) target = $region32
    $region31: #{asl_transformer_encoder_layer.4} parent=5 // pred_region
      %s276 = ssub.s32 %s7, 2
      // Predicated region
      $region33: #{asl_transformer_encoder_layer.4} parent=31 // pred_check
        %p277 = pneg %p78
      $region34: #{asl_transformer_encoder_layer.4} parent=31 // pred_check_branch
        %279 = sbr.rel (%p277) target = $region36
      $region35: #{asl_transformer_encoder_layer.4} parent=31 // pred_region
        %p280 = scmp.lt.s32.totalorder %s18, 1
        %s281 = scalar_select %p280, %s18, 1
        %p282 = scmp.lt.s32.totalorder %s19, 3
        %s283 = scalar_select %p282, %s19, 3
        %s284 = smul.addr %s281, 4
        %s285 = sadd.s32 %s283, %s284
        %s286 = smul.addr %s285, 4
        %s287 = scalar_lea.vmem %s1, %s286
      $region36: #{asl_transformer_encoder_layer.4} parent=31 // pred_fallthru
        _
    $region32: #{asl_transformer_encoder_layer.4} parent=5 // pred_fallthru
      _
  $region6: #{asl_transformer_encoder_layer.4} parent=0 // loop_footer
    %s11 = sadd.s32 1, %s7
  $region7: #{asl_transformer_encoder_layer.4} parent=0 // loop_footer_branch
    %6 = sbr.rel target = $region3
  $region8: #{asl_transformer_encoder_layer.4} parent=0 // loop_exit
    _

// kernel: asl_transformer_encoder_layer.5
$region0: #{asl_transformer_encoder_layer.5}
  #allocation0 [shape = 'u32[]', space=smem, size = 0x4, offset = 0x4, fixed_abs, tag = 'smem constant byte address 0x4 - core index']
  #allocation1 [shape = 'u32[144,128]{1,0:T(1,128)}', space=vmem, size = 0x12000, scoped, tag = 'internal scratch']
  #allocation2 [shape = 'f32[16,32]{1,0:T(8,128)}', space=vmem, size = 0x2000, scoped, tag = 'scratch operand']
  #allocation3 [shape = 'f32[16,32]{1,0:T(8,128)}', space=vmem, size = 0x2000, scoped, tag = 'scratch operand']
  %s0 = inlined_call_operand.vmem [shape: f32[16,32], index: 0, kind: input, shape index: {}]
  %s1 = inlined_call_operand.vmem [shape: bf16[16,32], index: 1, kind: input, shape index: {}]
  %s2 = inlined_call_operand.vmem [shape: bf16[32,32], index: 2, kind: input, shape index: {}]
  %s3 = inlined_call_operand.vmem [shape: f32[1,32], index: 3, kind: input, shape index: {}]
  %s4 = inlined_call_operand.vmem [shape: f32[1,32], index: 4, kind: input, shape index: {}]
  %s5 = inlined_call_operand.vmem [shape: f32[1,32], index: 5, kind: input, shape index: {}]
  %s6 = inlined_call_operand.vmem [shape: bf16[32,64], index: 6, kind: input, shape index: {}]
  %s7 = inlined_call_operand.vmem [shape: f32[1,64], index: 7, kind: input, shape index: {}]
  %s8 = inlined_call_operand.vmem [shape: bf16[64,32], index: 8, kind: input, shape index: {}]
  %s9 = inlined_call_operand.vmem [shape: f32[1,32], index: 9, kind: input, shape index: {}]
  %s10 = inlined_call_operand.vmem [shape: f32[1,32], index: 10, kind: input, shape index: {}]
  %s11 = inlined_call_operand.vmem [shape: f32[1,32], index: 11, kind: input, shape index: {}]
  %s12 = inlined_call_operand.hbm [shape: f32[16,32], index: 12, kind: output, shape index: {}]
  %s13 = sld [smem:[#allocation0]]
  $region66: #{asl_transformer_encoder_layer.5} parent=0
    _
  %s15 = ssub.s32 1, %s13
  %s16 = scalar_select 0, %s15, %s13
  $region1: #{asl_transformer_encoder_layer.5} parent=0
    #allocation4 [shape = 'u8[8192]{0}', space=vmem, size = 0x2000, scoped, tag = 'output window, operand 0, single buffered']
    #allocation5 [shape = 's32[1]{0}', space=sflag, size = 0x4, scoped, tag = 'scoped memory for asl_transformer_encoder_layer.5']
    %17 = vsyncpa [#allocation5], 0
    // Predicated region
    $region2: #{asl_transformer_encoder_layer.5} parent=1 // pred_check
      _
    $region3: #{asl_transformer_encoder_layer.5} parent=1 // pred_check_branch
      %19 = sbr.rel (0) target = $region5
    $region4: #{asl_transformer_encoder_layer.5} parent=1 // pred_region
      _
    $region5: #{asl_transformer_encoder_layer.5} parent=1 // pred_fallthru
      _
    // Predicated region
    $region6: #{asl_transformer_encoder_layer.5} parent=1 // pred_check
      _
    $region7: #{asl_transformer_encoder_layer.5} parent=1 // pred_check_branch
      %21 = sbr.rel (0) target = $region9
    $region8: #{asl_transformer_encoder_layer.5} parent=1 // pred_region
      _
    $region9: #{asl_transformer_encoder_layer.5} parent=1 // pred_fallthru
      _
    // Predicated region
    $region10: #{asl_transformer_encoder_layer.5} parent=1 // pred_check
      _
    $region11: #{asl_transformer_encoder_layer.5} parent=1 // pred_check_branch
      %23 = sbr.rel (0) target = $region13
    $region12: #{asl_transformer_encoder_layer.5} parent=1 // pred_region
      _
    $region13: #{asl_transformer_encoder_layer.5} parent=1 // pred_fallthru
      _
    // Predicated region
    $region14: #{asl_transformer_encoder_layer.5} parent=1 // pred_check
      _
    $region15: #{asl_transformer_encoder_layer.5} parent=1 // pred_check_branch
      %25 = sbr.rel (0) target = $region17
    $region16: #{asl_transformer_encoder_layer.5} parent=1 // pred_region
      _
    $region17: #{asl_transformer_encoder_layer.5} parent=1 // pred_fallthru
      _
    // Predicated region
    $region18: #{asl_transformer_encoder_layer.5} parent=1 // pred_check
      _
    $region19: #{asl_transformer_encoder_layer.5} parent=1 // pred_check_branch
      %27 = sbr.rel (0) target = $region21
    $region20: #{asl_transformer_encoder_layer.5} parent=1 // pred_region
      _
    $region21: #{asl_transformer_encoder_layer.5} parent=1 // pred_fallthru
      _
    // Predicated region
    $region22: #{asl_transformer_encoder_layer.5} parent=1 // pred_check
      _
    $region23: #{asl_transformer_encoder_layer.5} parent=1 // pred_check_branch
      %29 = sbr.rel (0) target = $region25
    $region24: #{asl_transformer_encoder_layer.5} parent=1 // pred_region
      _
    $region25: #{asl_transformer_encoder_layer.5} parent=1 // pred_fallthru
      _
    // Predicated region
    $region26: #{asl_transformer_encoder_layer.5} parent=1 // pred_check
      _
    $region27: #{asl_transformer_encoder_layer.5} parent=1 // pred_check_branch
      %31 = sbr.rel (0) target = $region29
    $region28: #{asl_transformer_encoder_layer.5} parent=1 // pred_region
      _
    $region29: #{asl_transformer_encoder_layer.5} parent=1 // pred_fallthru
      _
    // Predicated region
    $region30: #{asl_transformer_encoder_layer.5} parent=1 // pred_check
      _
    $region31: #{asl_transformer_encoder_layer.5} parent=1 // pred_check_branch
      %33 = sbr.rel (0) target = $region33
    $region32: #{asl_transformer_encoder_layer.5} parent=1 // pred_region
      _
    $region33: #{asl_transformer_encoder_layer.5} parent=1 // pred_fallthru
      _
    // Predicated region
    $region34: #{asl_transformer_encoder_layer.5} parent=1 // pred_check
      _
    $region35: #{asl_transformer_encoder_layer.5} parent=1 // pred_check_branch
      %35 = sbr.rel (0) target = $region37
    $region36: #{asl_transformer_encoder_layer.5} parent=1 // pred_region
      _
    $region37: #{asl_transformer_encoder_layer.5} parent=1 // pred_fallthru
      _
    // Predicated region
    $region38: #{asl_transformer_encoder_layer.5} parent=1 // pred_check
      _
    $region39: #{asl_transformer_encoder_layer.5} parent=1 // pred_check_branch
      %37 = sbr.rel (0) target = $region41
    $region40: #{asl_transformer_encoder_layer.5} parent=1 // pred_region
      _
    $region41: #{asl_transformer_encoder_layer.5} parent=1 // pred_fallthru
      _
    // Predicated region
    $region42: #{asl_transformer_encoder_layer.5} parent=1 // pred_check
      _
    $region43: #{asl_transformer_encoder_layer.5} parent=1 // pred_check_branch
      %39 = sbr.rel (0) target = $region45
    $region44: #{asl_transformer_encoder_layer.5} parent=1 // pred_region
      _
    $region45: #{asl_transformer_encoder_layer.5} parent=1 // pred_fallthru
      _
    // Predicated region
    $region46: #{asl_transformer_encoder_layer.5} parent=1 // pred_check
      _
    $region47: #{asl_transformer_encoder_layer.5} parent=1 // pred_check_branch
      %41 = sbr.rel (0) target = $region49
    $region48: #{asl_transformer_encoder_layer.5} parent=1 // pred_region
      _
    $region49: #{asl_transformer_encoder_layer.5} parent=1 // pred_fallthru
      _
    %p43 = scmp.eq.s32.totalorder 0, 0
    // Predicated region
    $region50: #{asl_transformer_encoder_layer.5} parent=1 // pred_check
      %p44 = pneg %p43
    $region51: #{asl_transformer_encoder_layer.5} parent=1 // pred_check_branch
      %46 = sbr.rel (%p44) target = $region53
    $region52: #{asl_transformer_encoder_layer.5} parent=1 // pred_region
      %v47 = vld [vmem:[%s1] sm:$0xf]
      %v48 = vld [vmem:[%s1 + $0x4] sm:$0xf]
      %v49 = vld [vmem:[%s2] sm:$0xf]
      %v50 = vld [vmem:[%s2 + $0x4] sm:$0xf]
      %v51 = vld [vmem:[%s2 + $0x8] sm:$0xf]
      %v52 = vld [vmem:[%s2 + $0xc] sm:$0xf]
      %v53 = vld [vmem:[%s3] sm:$0x1]
      %v55 = vlaneseq
      %v56 = vshrl.u32 %v55, 7
      %v57 = vsub.s32 0, %v56
      %v58 = vrot.slane %v53, %v57
      %v62 = vunpack.c.l.b16 %v47
      %v63 = vunpack.c.l.b16 %v48
      %v64 = vpack.c.b16 %v63, %v62
      %v69 = vunpack.c.l.b16 %v49
      %v70 = vunpack.c.l.b16 %v50
      %v71 = vunpack.c.l.b16 %v51
      %v72 = vunpack.c.l.b16 %v52
      %v73 = vpack.c.b16 %v70, %v69
      %v74 = vpack.c.b16 %v72, %v71
      %vm77 = vcmask 261120
      %v79 = vsel %vm77, %v64, 0
      %81 = vmatprep.subr.bf16.mxu0 0
      %82 = vmatpush1.bf16.msra.mxu0 0
      %83 = vmatprep.subr.bf16.mxu0 0
      %84 = vmatpush1.bf16.msra.mxu0 0
      %85 = vmatprep.subr.bf16.mxu0 0
      %86 = vmatpush1.bf16.msra.mxu0 0
      %87 = vmatprep.subr.bf16.mxu0 0
      %88 = vmatpush1.bf16.msra.mxu0 0
      %89 = vmatprep.subr.bf16.mxu0 0
      %90 = vmatpush1.bf16.msra.mxu0 0
      %91 = vmatprep.subr.bf16.mxu0 0
      %92 = vmatpush1.bf16.msra.mxu0 0
      %93 = vmatprep.subr.bf16.mxu0 0
      %94 = vmatpush1.bf16.msra.mxu0 %v74
      %95 = vmatprep.subr.bf16.mxu0 0
      %96 = vmatpush1.bf16.msra.mxu0 %v73
      %97 = vmatprep.subr.bf16.mxu0 0
      %98 = vmatpush2.bf16.msra.mxu0 0
      %99 = vmatprep.subr.bf16.mxu0 0
      %100 = vmatpush2.bf16.msra.mxu0 0
      %101 = vmatprep.subr.bf16.mxu0 0
      %102 = vmatpush2.bf16.msra.mxu0 0
      %103 = vmatprep.subr.bf16.mxu0 0
      %104 = vmatpush2.bf16.msra.mxu0 0
      %105 = vmatprep.subr.bf16.mxu0 0
      %106 = vmatpush2.bf16.msra.mxu0 0
      %107 = vmatprep.subr.bf16.mxu0 0
      %108 = vmatpush2.bf16.msra.mxu0 0
      %109 = vmatprep.subr.bf16.mxu0 0
      %110 = vmatpush2.bf16.msra.mxu0 0
      %111 = vmatprep.subr.bf16.mxu0 0
      %112 = vmatpush2.bf16.msra.mxu0 0
      %113 = vmatprep.mubr.bf16.mxu0 0
      %114 = vmatmul.mubr.bf16.gmra.mxu0 %v79
      %v115 = vpop.f32.mrf.mxu0
      %v116 = vadd.f32 %v58, %v115
      %v117 = vpop.f32.mrf.mxu0
      %v118 = vpop.f32.mrf.mxu0
      %v119 = vadd.f32 %v58, %v118
      %v120 = vpop.f32.mrf.mxu0
      %121 = vdwg.mxu0
      %v122 = vld [vmem:[%s0] sm:$0xff]
      %v123 = vld [vmem:[%s0 + $0x8] sm:$0xff]
      %v124 = vadd.f32 %v122, %v116
      %v125 = vadd.f32 %v123, %v119
      %v126 = vld [vmem:[%s4] sm:$0x1]
      %v127 = vld [vmem:[%s5] sm:$0x1]
      %v128 = vsel %vm77, %v124, 0.0
      %129 = vadd.xlane.f32.xlu0 %v128
      %v130 = vpop.xlane.xlu0 %129
      %v131 = vsel %vm77, %v125, 0.0
      %132 = vadd.xlane.f32.xlu0 %v131
      %v133 = vpop.xlane.xlu0 %132
      %v134 = vrcp.pop 32.0
      %v135 = vmul.f32 %v130, %v134
      %v136 = vmul.f32 %v133, %v134
      %v137 = vsub.f32 %v124, %v135
      %v138 = vsub.f32 %v125, %v136
      %v139 = vmul.f32 %v137, %v137
      %v140 = vmul.f32 %v138, %v138
      %v141 = vsel %vm77, %v139, 0.0
      %142 = vadd.xlane.f32.xlu0 %v141
      %v143 = vpop.xlane.xlu0 %142
      %v144 = vsel %vm77, %v140, 0.0
      %145 = vadd.xlane.f32.xlu0 %v144
      %v146 = vpop.xlane.xlu0 %145
      %v147 = vmul.f32 %v143, %v134
      %v148 = vmul.f32 %v146, %v134
      %v149 = vadd.f32 %v147, 1e-05
      %v150 = vadd.f32 %v148, 1e-05
      %v151 = vrsqrt.pop %v149
      %v152 = vrsqrt.pop %v150
      %v153 = vmul.f32 %v137, %v151
      %v154 = vmul.f32 %v138, %v152
      %v156 = vlaneseq
      %v157 = vshrl.u32 %v156, 7
      %v158 = vsub.s32 0, %v157
      %v159 = vrot.slane %v126, %v158
      %v161 = vmul.f32 %v153, %v159
      %v162 = vmul.f32 %v154, %v159
      %v164 = vlaneseq
      %v165 = vshrl.u32 %v164, 7
      %v166 = vsub.s32 0, %v165
      %v167 = vrot.slane %v127, %v166
      %v169 = vadd.f32 %v161, %v167
      %v170 = vadd.f32 %v162, %v167
      %171 = vst.msk [vmem:[#allocation2] sm:$0xff] %vm77, %v169
      %172 = vst.msk [vmem:[#allocation2 + $0x8] sm:$0xff] %vm77, %v170
      %173 = vst.msk [vmem:[#allocation3] sm:$0xff] %vm77, 0.0
      %174 = vst.msk [vmem:[#allocation3 + $0x8] sm:$0xff] %vm77, 0.0
    $region53: #{asl_transformer_encoder_layer.5} parent=1 // pred_fallthru
      _
    %v175 = vld [vmem:[#allocation2] sm:$0xff]
    %v176 = vld [vmem:[#allocation2 + $0x8] sm:$0xff]
    %v177 = vpack.c.bf16 %v176, %v175
    %v178 = vld [vmem:[%s6] sm:$0xf]
    %v179 = vld [vmem:[%s6 + $0x4] sm:$0xf]
    %v180 = vld [vmem:[%s6 + $0x8] sm:$0xf]
    %v181 = vld [vmem:[%s6 + $0xc] sm:$0xf]
    %v182 = vld [vmem:[%s7] sm:$0x1]
    %v184 = vlaneseq
    %v185 = vshrl.u32 %v184, 7
    %v186 = vsub.s32 0, %v185
    %v187 = vrot.slane %v182, %v186
    %v193 = vunpack.c.l.b16 %v178
    %v194 = vunpack.c.l.b16 %v179
    %v195 = vunpack.c.l.b16 %v180
    %v196 = vunpack.c.l.b16 %v181
    %v197 = vpack.c.b16 %v194, %v193
    %v198 = vpack.c.b16 %v196, %v195
    %vm201 = vcmask 261120
    %v203 = vsel %vm201, %v177, 0
    %205 = vmatprep.subr.bf16.mxu0 0
    %206 = vmatpush1.bf16.msra.mxu0 0
    %207 = vmatprep.subr.bf16.mxu0 0
    %208 = vmatpush1.bf16.msra.mxu0 0
    %209 = vmatprep.subr.bf16.mxu0 0
    %210 = vmatpush1.bf16.msra.mxu0 0
    %211 = vmatprep.subr.bf16.mxu0 0
    %212 = vmatpush1.bf16.msra.mxu0 0
    %213 = vmatprep.subr.bf16.mxu0 0
    %214 = vmatpush1.bf16.msra.mxu0 0
    %215 = vmatprep.subr.bf16.mxu0 0
    %216 = vmatpush1.bf16.msra.mxu0 0
    %217 = vmatprep.subr.bf16.mxu0 0
    %218 = vmatpush1.bf16.msra.mxu0 %v198
    %219 = vmatprep.subr.bf16.mxu0 0
    %220 = vmatpush1.bf16.msra.mxu0 %v197
    %221 = vmatprep.subr.bf16.mxu0 0
    %222 = vmatpush2.bf16.msra.mxu0 0
    %223 = vmatprep.subr.bf16.mxu0 0
    %224 = vmatpush2.bf16.msra.mxu0 0
    %225 = vmatprep.subr.bf16.mxu0 0
    %226 = vmatpush2.bf16.msra.mxu0 0
    %227 = vmatprep.subr.bf16.mxu0 0
    %228 = vmatpush2.bf16.msra.mxu0 0
    %229 = vmatprep.subr.bf16.mxu0 0
    %230 = vmatpush2.bf16.msra.mxu0 0
    %231 = vmatprep.subr.bf16.mxu0 0
    %232 = vmatpush2.bf16.msra.mxu0 0
    %233 = vmatprep.subr.bf16.mxu0 0
    %234 = vmatpush2.bf16.msra.mxu0 0
    %235 = vmatprep.subr.bf16.mxu0 0
    %236 = vmatpush2.bf16.msra.mxu0 0
    %237 = vmatprep.mubr.bf16.mxu0 0
    %238 = vmatmul.mubr.bf16.gmra.mxu0 %v203
    %v239 = vpop.f32.mrf.mxu0
    %v240 = vadd.f32 %v187, %v239
    %v241 = vpop.f32.mrf.mxu0
    %v242 = vpop.f32.mrf.mxu0
    %v243 = vadd.f32 %v187, %v242
    %v244 = vpop.f32.mrf.mxu0
    %245 = vdwg.mxu0
    %v246 = vmax.f32 %v240, 0.0
    %v247 = vmax.f32 %v243, 0.0
    %v248 = vpack.c.bf16 %v247, %v246
    %v249 = vld [vmem:[#allocation3] sm:$0xff]
    %v250 = vld [vmem:[#allocation3 + $0x8] sm:$0xff]
    %v251 = vld [vmem:[%s8] sm:$0xf]
    %v252 = vld [vmem:[%s8 + $0x4] sm:$0xf]
    %v253 = vld [vmem:[%s8 + $0x8] sm:$0xf]
    %v254 = vld [vmem:[%s8 + $0xc] sm:$0xf]
    %v255 = vld [vmem:[%s8 + $0x10] sm:$0xf]
    %v256 = vld [vmem:[%s8 + $0x14] sm:$0xf]
    %v257 = vld [vmem:[%s8 + $0x18] sm:$0xf]
    %v258 = vld [vmem:[%s8 + $0x1c] sm:$0xf]
    %v267 = vunpack.c.l.b16 %v251
    %v268 = vunpack.c.l.b16 %v252
    %v269 = vunpack.c.l.b16 %v253
    %v270 = vunpack.c.l.b16 %v254
    %v271 = vunpack.c.l.b16 %v255
    %v272 = vunpack.c.l.b16 %v256
    %v273 = vunpack.c.l.b16 %v257
    %v274 = vunpack.c.l.b16 %v258
    %v275 = vpack.c.b16 %v268, %v267
    %v276 = vpack.c.b16 %v270, %v269
    %v277 = vpack.c.b16 %v272, %v271
    %v278 = vpack.c.b16 %v274, %v273
    %vm283 = vcmask 523264
    %v285 = vsel %vm283, %v248, 0
    %287 = vmatprep.subr.bf16.mxu0 0
    %288 = vmatpush1.bf16.msra.mxu0 0
    %289 = vmatprep.subr.bf16.mxu0 0
    %290 = vmatpush1.bf16.msra.mxu0 0
    %291 = vmatprep.subr.bf16.mxu0 0
    %292 = vmatpush1.bf16.msra.mxu0 0
    %293 = vmatprep.subr.bf16.mxu0 0
    %294 = vmatpush1.bf16.msra.mxu0 0
    %295 = vmatprep.subr.bf16.mxu0 0
    %296 = vmatpush1.bf16.msra.mxu0 %v278
    %297 = vmatprep.subr.bf16.mxu0 0
    %298 = vmatpush1.bf16.msra.mxu0 %v277
    %299 = vmatprep.subr.bf16.mxu0 0
    %300 = vmatpush1.bf16.msra.mxu0 %v276
    %301 = vmatprep.subr.bf16.mxu0 0
    %302 = vmatpush1.bf16.msra.mxu0 %v275
    %303 = vmatprep.subr.bf16.mxu0 0
    %304 = vmatpush2.bf16.msra.mxu0 0
    %305 = vmatprep.subr.bf16.mxu0 0
    %306 = vmatpush2.bf16.msra.mxu0 0
    %307 = vmatprep.subr.bf16.mxu0 0
    %308 = vmatpush2.bf16.msra.mxu0 0
    %309 = vmatprep.subr.bf16.mxu0 0
    %310 = vmatpush2.bf16.msra.mxu0 0
    %311 = vmatprep.subr.bf16.mxu0 0
    %312 = vmatpush2.bf16.msra.mxu0 0
    %313 = vmatprep.subr.bf16.mxu0 0
    %314 = vmatpush2.bf16.msra.mxu0 0
    %315 = vmatprep.subr.bf16.mxu0 0
    %316 = vmatpush2.bf16.msra.mxu0 0
    %317 = vmatprep.subr.bf16.mxu0 0
    %318 = vmatpush2.bf16.msra.mxu0 0
    %319 = vmatprep.mubr.bf16.mxu0 0
    %320 = vmatmul.mubr.bf16.gmra.mxu0 %v285
    %v321 = vpop.f32.mrf.mxu0
    %v322 = vadd.f32 0.0, %v321
    %v323 = vpop.f32.mrf.mxu0
    %v324 = vpop.f32.mrf.mxu0
    %v325 = vadd.f32 0.0, %v324
    %v326 = vpop.f32.mrf.mxu0
    %327 = vdwg.mxu0
    %v328 = vadd.f32 %v249, %v322
    %v329 = vadd.f32 %v250, %v325
    %330 = vst.msk [vmem:[#allocation3] sm:$0xff] %vm201, %v328
    %331 = vst.msk [vmem:[#allocation3 + $0x8] sm:$0xff] %vm201, %v329
    // Predicated region
    $region54: #{asl_transformer_encoder_layer.5} parent=1 // pred_check
      %p332 = pneg %p43
    $region55: #{asl_transformer_encoder_layer.5} parent=1 // pred_check_branch
      %334 = sbr.rel (%p332) target = $region57
    $region56: #{asl_transformer_encoder_layer.5} parent=1 // pred_region
      %v335 = vld [vmem:[#allocation2] sm:$0xff]
      %v336 = vld [vmem:[#allocation2 + $0x8] sm:$0xff]
      %v337 = vld [vmem:[#allocation3] sm:$0xff]
      %v338 = vld [vmem:[#allocation3 + $0x8] sm:$0xff]
      %v339 = vadd.f32 %v335, %v337
      %v340 = vadd.f32 %v336, %v338
      %v341 = vld [vmem:[%s9] sm:$0x1]
      %v343 = vlaneseq
      %v344 = vshrl.u32 %v343, 7
      %v345 = vsub.s32 0, %v344
      %v346 = vrot.slane %v341, %v345
      %v348 = vadd.f32 %v339, %v346
      %v349 = vadd.f32 %v340, %v346
      %v350 = vld [vmem:[%s10] sm:$0x1]
      %v351 = vld [vmem:[%s11] sm:$0x1]
      %v352 = vsel %vm201, %v348, 0.0
      %353 = vadd.xlane.f32.xlu0 %v352
      %v354 = vpop.xlane.xlu0 %353
      %v355 = vsel %vm201, %v349, 0.0
      %356 = vadd.xlane.f32.xlu0 %v355
      %v357 = vpop.xlane.xlu0 %356
      %v358 = vrcp.pop 32.0
      %v359 = vmul.f32 %v354, %v358
      %v360 = vmul.f32 %v357, %v358
      %v361 = vsub.f32 %v348, %v359
      %v362 = vsub.f32 %v349, %v360
      %v363 = vmul.f32 %v361, %v361
      %v364 = vmul.f32 %v362, %v362
      %v365 = vsel %vm201, %v363, 0.0
      %366 = vadd.xlane.f32.xlu0 %v365
      %v367 = vpop.xlane.xlu0 %366
      %v368 = vsel %vm201, %v364, 0.0
      %369 = vadd.xlane.f32.xlu0 %v368
      %v370 = vpop.xlane.xlu0 %369
      %v371 = vmul.f32 %v367, %v358
      %v372 = vmul.f32 %v370, %v358
      %v373 = vadd.f32 %v371, 1e-05
      %v374 = vadd.f32 %v372, 1e-05
      %v375 = vrsqrt.pop %v373
      %v376 = vrsqrt.pop %v374
      %v377 = vmul.f32 %v361, %v375
      %v378 = vmul.f32 %v362, %v376
      %v380 = vlaneseq
      %v381 = vshrl.u32 %v380, 7
      %v382 = vsub.s32 0, %v381
      %v383 = vrot.slane %v350, %v382
      %v385 = vmul.f32 %v377, %v383
      %v386 = vmul.f32 %v378, %v383
      %v388 = vlaneseq
      %v389 = vshrl.u32 %v388, 7
      %v390 = vsub.s32 0, %v389
      %v391 = vrot.slane %v351, %v390
      %v393 = vadd.f32 %v385, %v391
      %v394 = vadd.f32 %v386, %v391
      %395 = vst.msk [vmem:[#allocation4] sm:$0xff] %vm201, %v393
      %396 = vst.msk [vmem:[#allocation4 + $0x8] sm:$0xff] %vm201, %v394
    $region57: #{asl_transformer_encoder_layer.5} parent=1 // pred_fallthru
      _
    // Predicated region
    $region58: #{asl_transformer_encoder_layer.5} parent=1 // pred_check
      _
    $region59: #{asl_transformer_encoder_layer.5} parent=1 // pred_check_branch
      %398 = sbr.rel (0) target = $region61
    $region60: #{asl_transformer_encoder_layer.5} parent=1 // pred_region
      %s400 = ssub.s32 256, 256
      %401 = vsyncadd [#allocation5], %s400
      %s402 = sshll.u32 [#allocation4], 4
      %s403 = int_to_ptr.vmem [resolvable:$true] %s402
      %408 = dma.vmem_to_hbm [thread:$0]  %s403, 256, %s12, [#allocation5], 128, 128, 8
    $region61: #{asl_transformer_encoder_layer.5} parent=1 // pred_fallthru
      _
    // Predicated region
    $region62: #{asl_transformer_encoder_layer.5} parent=1 // pred_check
      _
    $region63: #{asl_transformer_encoder_layer.5} parent=1 // pred_check_branch
      %410 = sbr.rel (0) target = $region65
    $region64: #{asl_transformer_encoder_layer.5} parent=1 // pred_region
      %411 = dma.done [#allocation5], 256
    $region65: #{asl_transformer_encoder_layer.5} parent=1 // pred_fallthru
      _
    %412 = vsyncpa [#allocation5], 1

</llo_original>
